<compile_context>
chip_gen: v7x
topology: tpu7x:2x2x1
jax: 0.10.0
libtpu: 0.0.40
codegen_flags: <defaults>
</compile_context>

<pallas_src>
import jax
import jax.numpy as jnp
from jax.experimental import pallas as pl
from jax.experimental.pallas import tpu as pltpu

_LEAK = 0.1
_H = 128  # padded hidden lane width


def _leaky_relu(h):
    # For a slope in (0, 1), max(h, slope*h) == LeakyReLU(slope)(h) exactly.
    return jnp.maximum(h, _LEAK * h)


def _mlp_kernel(x_ref, w1_ref, b1_ref, w2_ref, b2_ref, w3_ref, b3_ref,
                w4_ref, b4_ref, o_ref):
    wdt = w1_ref.dtype
    h = jnp.dot(x_ref[...], w1_ref[...],
                preferred_element_type=jnp.float32) + b1_ref[...]
    h = _leaky_relu(h)
    h = jnp.dot(h.astype(wdt), w2_ref[...],
                preferred_element_type=jnp.float32) + b2_ref[...]
    h = _leaky_relu(h)
    h = jnp.dot(h.astype(wdt), w3_ref[...],
                preferred_element_type=jnp.float32) + b3_ref[...]
    h = _leaky_relu(h)
    h = jnp.dot(h.astype(wdt), w4_ref[...],
                preferred_element_type=jnp.float32) + b4_ref[...]
    o_ref[...] = h.astype(o_ref.dtype)


def _round_up(v, m):
    return (v + m - 1) // m * m


def _default_block_b():
    # Larger batch tiles on v7x (3.2 TB/s HBM makes small tiles pure overhead).
    try:
        kind = jax.devices()[0].device_kind.lower()
        if "v7" in kind:
            return 4096
    except Exception:
        pass
    return 2048


def non_img_decoder_pallas(x, params, *, block_b=None):
    """Equivalent of Non_Img_Decoder.forward: (B, z_dim) -> (B, out_dim)."""
    w1, b1, w2, b2, w3, b3, w4, b4 = params
    B, z_dim = x.shape
    out_dim = w4.shape[1]
    if block_b is None:
        block_b = _default_block_b()
    itemsize = jnp.dtype(x.dtype).itemsize

    # --- Weight / bias preprocessing (once, tiny tensors) -------------------
    # Zero-pad hidden widths 64/32 up to 128 lanes: exact because padded
    # weight rows/cols and biases are zero and LeakyReLU(0)=0.
    w2p = jnp.zeros((_H, _H), w2.dtype).at[:w2.shape[0], :w2.shape[1]].set(w2)
    w3p = jnp.zeros((_H, _H), w3.dtype).at[:w3.shape[0], :w3.shape[1]].set(w3)
    w4p = jnp.zeros((_H, out_dim), w4.dtype).at[:w4.shape[0], :].set(w4)

    # Weights in the input dtype (native bf16 MXU path if x is bf16).
    w1c, w2c, w3c, w4c = (w.astype(x.dtype) for w in (w1, w2p, w3p, w4p))

    # Biases as f32 (1, d) rows for clean 2-D broadcast in the f32 accumulator.
    b1r = b1.reshape(1, -1).astype(jnp.float32)
    b2r = jnp.zeros((1, _H), jnp.float32).at[0, :b2.shape[0]].set(b2)
    b3r = jnp.zeros((1, _H), jnp.float32).at[0, :b3.shape[0]].set(b3)
    b4r = b4.reshape(1, -1).astype(jnp.float32)

    # --- Batch tiling (no full-batch pad; partial boundary block is fine) ---
    tb = min(block_b, _round_up(B, 8))          # multiple of 8 -> valid block
    if B > 512 and pl.cdiv(B, tb) < 2:
        # Split mid-size batches into >=2 tiles so the parallel grid axis can
        # shard across both TensorCores on v7x.
        tb = _round_up(pl.cdiv(B, 2), 8)
    grid = (pl.cdiv(B, tb),)

    flops = 2 * B * (z_dim * 128 + _H * _H + _H * _H + _H * out_dim)
    bytes_accessed = (
        B * z_dim * itemsize
        + B * out_dim * itemsize
        + sum(int(a.size) * jnp.dtype(a.dtype).itemsize
              for a in (w1c, b1r, w2c, b2r, w3c, b3r, w4c, b4r))
    )

    out = pl.pallas_call(
        _mlp_kernel,
        out_shape=jax.ShapeDtypeStruct((B, out_dim), x.dtype),
        grid=grid,
        in_specs=[
            pl.BlockSpec((tb, z_dim), lambda i: (i, 0)),   # x tile (pipelined)
            pl.BlockSpec(w1c.shape, lambda i: (0, 0)),     # weights: resident
            pl.BlockSpec(b1r.shape, lambda i: (0, 0)),
            pl.BlockSpec(w2c.shape, lambda i: (0, 0)),
            pl.BlockSpec(b2r.shape, lambda i: (0, 0)),
            pl.BlockSpec(w3c.shape, lambda i: (0, 0)),
            pl.BlockSpec(b3r.shape, lambda i: (0, 0)),
            pl.BlockSpec(w4c.shape, lambda i: (0, 0)),
            pl.BlockSpec(b4r.shape, lambda i: (0, 0)),
        ],
        out_specs=pl.BlockSpec((tb, out_dim), lambda i: (i, 0)),
        compiler_params=pltpu.CompilerParams(
            dimension_semantics=("parallel",),
            vmem_limit_bytes=32 * 1024 * 1024,
        ),
        cost_estimate=pl.CostEstimate(
            flops=flops, transcendentals=0, bytes_accessed=bytes_accessed),
    )(x, w1c, b1r, w2c, b2r, w3c, b3r, w4c, b4r)

    return out


def _ref_forward(x, params):
    """Pure-JAX reference matching the PyTorch module semantics."""
    w1, b1, w2, b2, w3, b3, w4, b4 = params
    lr = lambda h: jnp.where(h >= 0, h, _LEAK * h)
    h = lr(x @ w1 + b1)
    h = lr(h @ w2 + b2)
    h = lr(h @ w3 + b3)
    return h @ w4 + b4


if __name__ == "__main__":
    key = jax.random.PRNGKey(0)
    z_dim, out_dim = 128, 6
    ks = jax.random.split(key, 10)

    def kaiming(k, shape):
        fan_in = shape[0]
        return jax.random.normal(k, shape, jnp.float32) * jnp.sqrt(2.0 / fan_in)

    w1 = kaiming(ks[0], (z_dim, 128))
    w2 = kaiming(ks[1], (128, 64))
    w3 = kaiming(ks[2], (64, 32))
    w4 = kaiming(ks[3], (32, out_dim))
    b1 = jax.random.normal(ks[4], (128,), jnp.float32) * 0.01
    b2 = jax.random.normal(ks[5], (64,), jnp.float32) * 0.01
    b3 = jax.random.normal(ks[6], (32,), jnp.float32) * 0.01
    b4 = jax.random.normal(ks[7], (out_dim,), jnp.float32) * 0.01
    params = (w1, b1, w2, b2, w3, b3, w4, b4)

    # Tile-aligned small batch.
    x = jax.random.normal(ks[8], (8, z_dim), jnp.float32)
    out = jax.block_until_ready(non_img_decoder_pallas(x, params))
    ref = _ref_forward(x, params)
    assert out.shape == (8, out_dim), out.shape
    assert out.dtype == x.dtype
    assert bool(jnp.allclose(out, ref, atol=1e-3, rtol=1e-3)), float(
        jnp.max(jnp.abs(out - ref)))

    # Ragged batch (exercises the partial boundary block, no host-side pad).
    x2 = jax.random.normal(ks[9], (13, z_dim), jnp.float32)
    out2 = jax.block_until_ready(non_img_decoder_pallas(x2, params))
    ref2 = _ref_forward(x2, params)
    assert out2.shape == (13, out_dim), out2.shape
    assert bool(jnp.allclose(out2, ref2, atol=1e-3, rtol=1e-3)), float(
        jnp.max(jnp.abs(out2 - ref2)))

    print("KERNEL_OK")
</pallas_src>

<mosaic_0001>
module attributes {stable_mosaic.version = 11 : i64} {
  func.func @_mlp_kernel(%arg0: i32, %arg1: memref<8x128xf32, #tpu.memory_space<vmem>>, %arg2: memref<128x128xf32, #tpu.memory_space<vmem>>, %arg3: memref<1x128xf32, #tpu.memory_space<vmem>>, %arg4: memref<128x128xf32, #tpu.memory_space<vmem>>, %arg5: memref<1x128xf32, #tpu.memory_space<vmem>>, %arg6: memref<128x128xf32, #tpu.memory_space<vmem>>, %arg7: memref<1x128xf32, #tpu.memory_space<vmem>>, %arg8: memref<128x6xf32, #tpu.memory_space<vmem>>, %arg9: memref<1x6xf32, #tpu.memory_space<vmem>>, %arg10: memref<8x6xf32, #tpu.memory_space<vmem>>) attributes {dimension_semantics = [#tpu.dimension_semantics<parallel>], iteration_bounds = array<i64: 1>, scalar_prefetch = 0 : i64, scratch_operands = 0 : i64, tpu.core_type = #tpu.core_type<tc>, window_params = [{transform_indices = @transform_0, window_bounds = array<i64: 8, 128>}, {pipeline_mode = #tpu.pipeline_mode<synchronous>, transform_indices = @transform_1, window_bounds = array<i64: 128, 128>}, {pipeline_mode = #tpu.pipeline_mode<synchronous>, transform_indices = @transform_2, window_bounds = array<i64: 1, 128>}, {pipeline_mode = #tpu.pipeline_mode<synchronous>, transform_indices = @transform_3, window_bounds = array<i64: 128, 128>}, {pipeline_mode = #tpu.pipeline_mode<synchronous>, transform_indices = @transform_4, window_bounds = array<i64: 1, 128>}, {pipeline_mode = #tpu.pipeline_mode<synchronous>, transform_indices = @transform_5, window_bounds = array<i64: 128, 128>}, {pipeline_mode = #tpu.pipeline_mode<synchronous>, transform_indices = @transform_6, window_bounds = array<i64: 1, 128>}, {pipeline_mode = #tpu.pipeline_mode<synchronous>, transform_indices = @transform_7, window_bounds = array<i64: 128, 6>}, {pipeline_mode = #tpu.pipeline_mode<synchronous>, transform_indices = @transform_8, window_bounds = array<i64: 1, 6>}, {transform_indices = @transform_9, window_bounds = array<i64: 8, 6>}]} {
    %c0 = arith.constant 0 : index
    %c0_0 = arith.constant 0 : index
    %0 = vector.load %arg1[%c0, %c0_0] : memref<8x128xf32, #tpu.memory_space<vmem>>, vector<8x128xf32>
    %c0_1 = arith.constant 0 : index
    %c0_2 = arith.constant 0 : index
    %1 = vector.load %arg2[%c0_1, %c0_2] : memref<128x128xf32, #tpu.memory_space<vmem>>, vector<128x128xf32>
    %cst = arith.constant dense<0.000000e+00> : vector<8x128xf32>
    %2 = tpu.matmul %0, %1, %cst {dimension_numbers = #tpu.dot_dimension_numbers<[1], [0], [0], [1], [0, 0, 1, 1], [], []>} : vector<8x128xf32>, vector<128x128xf32>, vector<8x128xf32> -> vector<8x128xf32>
    %c0_3 = arith.constant 0 : index
    %c0_4 = arith.constant 0 : index
    %3 = vector.load %arg3[%c0_3, %c0_4] : memref<1x128xf32, #tpu.memory_space<vmem>>, vector<1x128xf32>
    %4 = vector.broadcast %3 : vector<1x128xf32> to vector<8x128xf32>
    %5 = arith.addf %2, %4 : vector<8x128xf32>
    %cst_5 = arith.constant 1.000000e-01 : f32
    %6 = vector.broadcast %cst_5 : f32 to vector<8x128xf32>
    %7 = arith.mulf %6, %5 : vector<8x128xf32>
    %8 = arith.maximumf %5, %7 : vector<8x128xf32>
    %c0_6 = arith.constant 0 : index
    %c0_7 = arith.constant 0 : index
    %9 = vector.load %arg4[%c0_6, %c0_7] : memref<128x128xf32, #tpu.memory_space<vmem>>, vector<128x128xf32>
    %cst_8 = arith.constant dense<0.000000e+00> : vector<8x128xf32>
    %10 = tpu.matmul %8, %9, %cst_8 {dimension_numbers = #tpu.dot_dimension_numbers<[1], [0], [0], [1], [0, 0, 1, 1], [], []>} : vector<8x128xf32>, vector<128x128xf32>, vector<8x128xf32> -> vector<8x128xf32>
    %c0_9 = arith.constant 0 : index
    %c0_10 = arith.constant 0 : index
    %11 = vector.load %arg5[%c0_9, %c0_10] : memref<1x128xf32, #tpu.memory_space<vmem>>, vector<1x128xf32>
    %12 = vector.broadcast %11 : vector<1x128xf32> to vector<8x128xf32>
    %13 = arith.addf %10, %12 : vector<8x128xf32>
    %cst_11 = arith.constant 1.000000e-01 : f32
    %14 = vector.broadcast %cst_11 : f32 to vector<8x128xf32>
    %15 = arith.mulf %14, %13 : vector<8x128xf32>
    %16 = arith.maximumf %13, %15 : vector<8x128xf32>
    %c0_12 = arith.constant 0 : index
    %c0_13 = arith.constant 0 : index
    %17 = vector.load %arg6[%c0_12, %c0_13] : memref<128x128xf32, #tpu.memory_space<vmem>>, vector<128x128xf32>
    %cst_14 = arith.constant dense<0.000000e+00> : vector<8x128xf32>
    %18 = tpu.matmul %16, %17, %cst_14 {dimension_numbers = #tpu.dot_dimension_numbers<[1], [0], [0], [1], [0, 0, 1, 1], [], []>} : vector<8x128xf32>, vector<128x128xf32>, vector<8x128xf32> -> vector<8x128xf32>
    %c0_15 = arith.constant 0 : index
    %c0_16 = arith.constant 0 : index
    %19 = vector.load %arg7[%c0_15, %c0_16] : memref<1x128xf32, #tpu.memory_space<vmem>>, vector<1x128xf32>
    %20 = vector.broadcast %19 : vector<1x128xf32> to vector<8x128xf32>
    %21 = arith.addf %18, %20 : vector<8x128xf32>
    %cst_17 = arith.constant 1.000000e-01 : f32
    %22 = vector.broadcast %cst_17 : f32 to vector<8x128xf32>
    %23 = arith.mulf %22, %21 : vector<8x128xf32>
    %24 = arith.maximumf %21, %23 : vector<8x128xf32>
    %c0_18 = arith.constant 0 : index
    %c0_19 = arith.constant 0 : index
    %25 = vector.load %arg8[%c0_18, %c0_19] : memref<128x6xf32, #tpu.memory_space<vmem>>, vector<128x6xf32>
    %cst_20 = arith.constant dense<0.000000e+00> : vector<8x6xf32>
    %26 = tpu.matmul %24, %25, %cst_20 {dimension_numbers = #tpu.dot_dimension_numbers<[1], [0], [0], [1], [0, 0, 1, 1], [], []>} : vector<8x128xf32>, vector<128x6xf32>, vector<8x6xf32> -> vector<8x6xf32>
    %c0_21 = arith.constant 0 : index
    %c0_22 = arith.constant 0 : index
    %27 = vector.load %arg9[%c0_21, %c0_22] : memref<1x6xf32, #tpu.memory_space<vmem>>, vector<1x6xf32>
    %28 = vector.broadcast %27 : vector<1x6xf32> to vector<8x6xf32>
    %29 = arith.addf %26, %28 : vector<8x6xf32>
    %c0_23 = arith.constant 0 : index
    %c0_24 = arith.constant 0 : index
    %30 = vector.load %arg10[%c0_23, %c0_24] : memref<8x6xf32, #tpu.memory_space<vmem>>, vector<8x6xf32>
    tpu.vector_store %arg10[%c0_23, %c0_24], %29 {strides = array<i32>} : memref<8x6xf32, #tpu.memory_space<vmem>>, vector<8x6xf32>,
    return
  }
  func.func @transform_0(%arg0: i32) -> (i32, i32) {
    %c0_i32 = arith.constant 0 : i32
    %c0_i32_0 = arith.constant 0 : i32
    return %arg0, %c0_i32 : i32, i32
  }
  func.func @transform_1(%arg0: i32) -> (i32, i32) {
    %c0_i32 = arith.constant 0 : i32
    %c0_i32_0 = arith.constant 0 : i32
    %c0_i32_1 = arith.constant 0 : i32
    return %c0_i32, %c0_i32_0 : i32, i32
  }
  func.func @transform_2(%arg0: i32) -> (i32, i32) {
    %c0_i32 = arith.constant 0 : i32
    %c0_i32_0 = arith.constant 0 : i32
    %c0_i32_1 = arith.constant 0 : i32
    return %c0_i32, %c0_i32_0 : i32, i32
  }
  func.func @transform_3(%arg0: i32) -> (i32, i32) {
    %c0_i32 = arith.constant 0 : i32
    %c0_i32_0 = arith.constant 0 : i32
    %c0_i32_1 = arith.constant 0 : i32
    return %c0_i32, %c0_i32_0 : i32, i32
  }
  func.func @transform_4(%arg0: i32) -> (i32, i32) {
    %c0_i32 = arith.constant 0 : i32
    %c0_i32_0 = arith.constant 0 : i32
    %c0_i32_1 = arith.constant 0 : i32
    return %c0_i32, %c0_i32_0 : i32, i32
  }
  func.func @transform_5(%arg0: i32) -> (i32, i32) {
    %c0_i32 = arith.constant 0 : i32
    %c0_i32_0 = arith.constant 0 : i32
    %c0_i32_1 = arith.constant 0 : i32
    return %c0_i32, %c0_i32_0 : i32, i32
  }
  func.func @transform_6(%arg0: i32) -> (i32, i32) {
    %c0_i32 = arith.constant 0 : i32
    %c0_i32_0 = arith.constant 0 : i32
    %c0_i32_1 = arith.constant 0 : i32
    return %c0_i32, %c0_i32_0 : i32, i32
  }
  func.func @transform_7(%arg0: i32) -> (i32, i32) {
    %c0_i32 = arith.constant 0 : i32
    %c0_i32_0 = arith.constant 0 : i32
    %c0_i32_1 = arith.constant 0 : i32
    return %c0_i32, %c0_i32_0 : i32, i32
  }
  func.func @transform_8(%arg0: i32) -> (i32, i32) {
    %c0_i32 = arith.constant 0 : i32
    %c0_i32_0 = arith.constant 0 : i32
    %c0_i32_1 = arith.constant 0 : i32
    return %c0_i32, %c0_i32_0 : i32, i32
  }
  func.func @transform_9(%arg0: i32) -> (i32, i32) {
    %c0_i32 = arith.constant 0 : i32
    %c0_i32_0 = arith.constant 0 : i32
    return %arg0, %c0_i32 : i32, i32
  }
}

</mosaic_0001>

<llo_original>
// kernel: tpu_custom_call.1
$region0: #{tpu_custom_call.1}
  #allocation0 [shape = 'u32[]', space=smem, size = 0x4, offset = 0x4, fixed_abs, tag = 'smem constant byte address 0x4 - core index']
  #allocation1 [shape = 'u32[144,128]{1,0:T(1,128)}', space=vmem, size = 0x12000, scoped, tag = 'internal scratch']
  %s0 = inlined_call_operand.vmem [shape: f32[8,128], index: 0, kind: input, shape index: {}]
  %s1 = inlined_call_operand.vmem [shape: f32[128,128], index: 1, kind: input, shape index: {}]
  %s2 = inlined_call_operand.vmem [shape: f32[1,128], index: 2, kind: input, shape index: {}]
  %s3 = inlined_call_operand.hbm [shape: f32[128,128], index: 3, kind: input, shape index: {}]
  %s4 = inlined_call_operand.vmem [shape: f32[1,128], index: 4, kind: input, shape index: {}]
  %s5 = inlined_call_operand.hbm [shape: f32[128,128], index: 5, kind: input, shape index: {}]
  %s6 = inlined_call_operand.vmem [shape: f32[1,128], index: 6, kind: input, shape index: {}]
  %s7 = inlined_call_operand.vmem [shape: f32[128,6], index: 7, kind: input, shape index: {}]
  %s8 = inlined_call_operand.vmem [shape: f32[1,6], index: 8, kind: input, shape index: {}]
  %s9 = inlined_call_operand.hbm [shape: f32[8,6], index: 9, kind: output, shape index: {}]
  %s10 = sld [smem:[#allocation0]]
  $region54: #{tpu_custom_call.1} parent=0
    _
  %s12 = ssub.s32 1, %s10
  %s13 = scalar_select 0, %s12, %s10
  $region1: #{tpu_custom_call.1} parent=0
    #allocation2 [shape = 'u8[65536]{0}', space=vmem, size = 0x10000, scoped, tag = 'input window, operand 3, single buffered']
    #allocation3 [shape = 's32[1]{0}', space=sflag, size = 0x4, scoped, tag = 'scoped memory for tpu_custom_call.1']
    #allocation4 [shape = 's32[1]{0}', space=sflag, size = 0x4, scoped, tag = 'scoped memory for tpu_custom_call.1']
    #allocation5 [shape = 'u8[65536]{0}', space=vmem, size = 0x10000, scoped, tag = 'input window, operand 5, single buffered']
    #allocation6 [shape = 's32[1]{0}', space=sflag, size = 0x4, scoped, tag = 'scoped memory for tpu_custom_call.1']
    #allocation7 [shape = 'u8[4096]{0}', space=vmem, size = 0x1000, scoped, tag = 'output window, operand 0, single buffered']
    %14 = vsyncpa [#allocation3], 0
    %15 = vsyncpa [#allocation6], 0
    %16 = vsyncpa [#allocation4], 0
    // Predicated region
    $region2: #{tpu_custom_call.1} parent=1 // pred_check
      _
    $region3: #{tpu_custom_call.1} parent=1 // pred_check_branch
      %18 = sbr.rel (0) target = $region5
    $region4: #{tpu_custom_call.1} parent=1 // pred_region
      _
    $region5: #{tpu_custom_call.1} parent=1 // pred_fallthru
      _
    // Predicated region
    $region6: #{tpu_custom_call.1} parent=1 // pred_check
      _
    $region7: #{tpu_custom_call.1} parent=1 // pred_check_branch
      %20 = sbr.rel (0) target = $region9
    $region8: #{tpu_custom_call.1} parent=1 // pred_region
      _
    $region9: #{tpu_custom_call.1} parent=1 // pred_fallthru
      _
    // Predicated region
    $region10: #{tpu_custom_call.1} parent=1 // pred_check
      _
    $region11: #{tpu_custom_call.1} parent=1 // pred_check_branch
      %22 = sbr.rel (0) target = $region13
    $region12: #{tpu_custom_call.1} parent=1 // pred_region
      _
    $region13: #{tpu_custom_call.1} parent=1 // pred_fallthru
      _
    // Predicated region
    $region14: #{tpu_custom_call.1} parent=1 // pred_check
      _
    $region15: #{tpu_custom_call.1} parent=1 // pred_check_branch
      %24 = sbr.rel (0) target = $region17
    $region16: #{tpu_custom_call.1} parent=1 // pred_region
      %s26 = ssub.s32 2048, 2048
      %27 = vsyncadd [#allocation3], %s26
      %s28 = sshll.u32 [#allocation2], 4
      %s29 = int_to_ptr.vmem [resolvable:$true] %s28
      %34 = dma.hbm_to_vmem [thread:$0]  %s3, 2048, %s29, [#allocation3], 128, 128, 8
    $region17: #{tpu_custom_call.1} parent=1 // pred_fallthru
      _
    // Predicated region
    $region18: #{tpu_custom_call.1} parent=1 // pred_check
      _
    $region19: #{tpu_custom_call.1} parent=1 // pred_check_branch
      %36 = sbr.rel (0) target = $region21
    $region20: #{tpu_custom_call.1} parent=1 // pred_region
      _
    $region21: #{tpu_custom_call.1} parent=1 // pred_fallthru
      _
    // Predicated region
    $region22: #{tpu_custom_call.1} parent=1 // pred_check
      _
    $region23: #{tpu_custom_call.1} parent=1 // pred_check_branch
      %38 = sbr.rel (0) target = $region25
    $region24: #{tpu_custom_call.1} parent=1 // pred_region
      %s40 = ssub.s32 2048, 2048
      %41 = vsyncadd [#allocation6], %s40
      %s42 = sshll.u32 [#allocation5], 4
      %s43 = int_to_ptr.vmem [resolvable:$true] %s42
      %48 = dma.hbm_to_vmem [thread:$0]  %s5, 2048, %s43, [#allocation6], 128, 128, 8
    $region25: #{tpu_custom_call.1} parent=1 // pred_fallthru
      _
    // Predicated region
    $region26: #{tpu_custom_call.1} parent=1 // pred_check
      _
    $region27: #{tpu_custom_call.1} parent=1 // pred_check_branch
      %50 = sbr.rel (0) target = $region29
    $region28: #{tpu_custom_call.1} parent=1 // pred_region
      _
    $region29: #{tpu_custom_call.1} parent=1 // pred_fallthru
      _
    // Predicated region
    $region30: #{tpu_custom_call.1} parent=1 // pred_check
      _
    $region31: #{tpu_custom_call.1} parent=1 // pred_check_branch
      %52 = sbr.rel (0) target = $region33
    $region32: #{tpu_custom_call.1} parent=1 // pred_region
      _
    $region33: #{tpu_custom_call.1} parent=1 // pred_fallthru
      _
    // Predicated region
    $region34: #{tpu_custom_call.1} parent=1 // pred_check
      _
    $region35: #{tpu_custom_call.1} parent=1 // pred_check_branch
      %54 = sbr.rel (0) target = $region37
    $region36: #{tpu_custom_call.1} parent=1 // pred_region
      _
    $region37: #{tpu_custom_call.1} parent=1 // pred_fallthru
      _
    // Predicated region
    $region38: #{tpu_custom_call.1} parent=1 // pred_check
      _
    $region39: #{tpu_custom_call.1} parent=1 // pred_check_branch
      %56 = sbr.rel (0) target = $region41
    $region40: #{tpu_custom_call.1} parent=1 // pred_region
      %57 = dma.done [#allocation3], 2048
    $region41: #{tpu_custom_call.1} parent=1 // pred_fallthru
      _
    // Predicated region
    $region42: #{tpu_custom_call.1} parent=1 // pred_check
      _
    $region43: #{tpu_custom_call.1} parent=1 // pred_check_branch
      %59 = sbr.rel (0) target = $region45
    $region44: #{tpu_custom_call.1} parent=1 // pred_region
      %60 = dma.done [#allocation6], 2048
    $region45: #{tpu_custom_call.1} parent=1 // pred_fallthru
      _
    %v61 = vld [vmem:[%s0] sm:$0xff]
    %v62 = vld [vmem:[%s1] sm:$0xff]
    %v63 = vld [vmem:[%s1 + $0x8] sm:$0xff]
    %v64 = vld [vmem:[%s1 + $0x10] sm:$0xff]
    %v65 = vld [vmem:[%s1 + $0x18] sm:$0xff]
    %v66 = vld [vmem:[%s1 + $0x20] sm:$0xff]
    %v67 = vld [vmem:[%s1 + $0x28] sm:$0xff]
    %v68 = vld [vmem:[%s1 + $0x30] sm:$0xff]
    %v69 = vld [vmem:[%s1 + $0x38] sm:$0xff]
    %v70 = vld [vmem:[%s1 + $0x40] sm:$0xff]
    %v71 = vld [vmem:[%s1 + $0x48] sm:$0xff]
    %v72 = vld [vmem:[%s1 + $0x50] sm:$0xff]
    %v73 = vld [vmem:[%s1 + $0x58] sm:$0xff]
    %v74 = vld [vmem:[%s1 + $0x60] sm:$0xff]
    %v75 = vld [vmem:[%s1 + $0x68] sm:$0xff]
    %v76 = vld [vmem:[%s1 + $0x70] sm:$0xff]
    %v77 = vld [vmem:[%s1 + $0x78] sm:$0xff]
    %v78 = vld [vmem:[%s2] sm:$0x1]
    %v80 = vlaneseq
    %v81 = vshrl.u32 %v80, 7
    %v82 = vsub.s32 0, %v81
    %v83 = vrot.slane %v78, %v82
    %85 = vmatprep.subr.mxu0 0.0
    %86 = vmatpush1.msra.mxu0 %v62
    %87 = vmatprep.subr.mxu0 0.0
    %88 = vmatpush1.msra.mxu0 %v63
    %89 = vmatprep.subr.mxu0 0.0
    %90 = vmatpush1.msra.mxu0 %v64
    %91 = vmatprep.subr.mxu0 0.0
    %92 = vmatpush1.msra.mxu0 %v65
    %93 = vmatprep.subr.mxu0 0.0
    %94 = vmatpush1.msra.mxu0 %v66
    %95 = vmatprep.subr.mxu0 0.0
    %96 = vmatpush1.msra.mxu0 %v67
    %97 = vmatprep.subr.mxu0 0.0
    %98 = vmatpush1.msra.mxu0 %v68
    %99 = vmatprep.subr.mxu0 0.0
    %100 = vmatpush1.msra.mxu0 %v69
    %101 = vmatprep.subr.mxu0 0.0
    %102 = vmatpush1.msra.mxu0 %v70
    %103 = vmatprep.subr.mxu0 0.0
    %104 = vmatpush1.msra.mxu0 %v71
    %105 = vmatprep.subr.mxu0 0.0
    %106 = vmatpush1.msra.mxu0 %v72
    %107 = vmatprep.subr.mxu0 0.0
    %108 = vmatpush1.msra.mxu0 %v73
    %109 = vmatprep.subr.mxu0 0.0
    %110 = vmatpush1.msra.mxu0 %v74
    %111 = vmatprep.subr.mxu0 0.0
    %112 = vmatpush1.msra.mxu0 %v75
    %113 = vmatprep.subr.mxu0 0.0
    %114 = vmatpush1.msra.mxu0 %v76
    %115 = vmatprep.subr.mxu0 0.0
    %116 = vmatpush1.msra.mxu0 %v77
    %117 = vmatprep.subr.mxu0 0.0
    %118 = vmatpush1.msra.mxu0 0.0
    %119 = vmatprep.subr.mxu0 0.0
    %120 = vmatpush1.msra.mxu0 0.0
    %121 = vmatprep.subr.mxu0 0.0
    %122 = vmatpush1.msra.mxu0 0.0
    %123 = vmatprep.subr.mxu0 0.0
    %124 = vmatpush1.msra.mxu0 0.0
    %125 = vmatprep.subr.mxu0 0.0
    %126 = vmatpush1.msra.mxu0 0.0
    %127 = vmatprep.subr.mxu0 0.0
    %128 = vmatpush1.msra.mxu0 0.0
    %129 = vmatprep.subr.mxu0 0.0
    %130 = vmatpush1.msra.mxu0 0.0
    %131 = vmatprep.subr.mxu0 0.0
    %132 = vmatpush1.msra.mxu0 0.0
    %133 = vmatprep.subr.mxu0 0.0
    %134 = vmatpush1.msra.mxu0 0.0
    %135 = vmatprep.subr.mxu0 0.0
    %136 = vmatpush1.msra.mxu0 0.0
    %137 = vmatprep.subr.mxu0 0.0
    %138 = vmatpush1.msra.mxu0 0.0
    %139 = vmatprep.subr.mxu0 0.0
    %140 = vmatpush1.msra.mxu0 0.0
    %141 = vmatprep.subr.mxu0 0.0
    %142 = vmatpush1.msra.mxu0 0.0
    %143 = vmatprep.subr.mxu0 0.0
    %144 = vmatpush1.msra.mxu0 0.0
    %145 = vmatprep.subr.mxu0 0.0
    %146 = vmatpush1.msra.mxu0 0.0
    %147 = vmatprep.subr.mxu0 0.0
    %148 = vmatpush1.msra.mxu0 0.0
    %149 = vmatprep.mubr.f32.mxu0 0.0
    %150 = vmatmul.mubr.f32.gmra.mrb[0].mxu0 %v61
    %v151 = vpop.f32.mrb[0].mxu0
    %v152 = vadd.f32 %v83, %v151
    %v153 = vpop.f32.mrb[0].mxu0
    %154 = vdwg.mxu0
    %v155 = vmul.f32 %v152, 0.1
    %v156 = vmax.f32 %v152, %v155
    %v157 = vld [vmem:[#allocation2] sm:$0xff]
    %v158 = vld [vmem:[#allocation2 + $0x8] sm:$0xff]
    %v159 = vld [vmem:[#allocation2 + $0x10] sm:$0xff]
    %v160 = vld [vmem:[#allocation2 + $0x18] sm:$0xff]
    %v161 = vld [vmem:[#allocation2 + $0x20] sm:$0xff]
    %v162 = vld [vmem:[#allocation2 + $0x28] sm:$0xff]
    %v163 = vld [vmem:[#allocation2 + $0x30] sm:$0xff]
    %v164 = vld [vmem:[#allocation2 + $0x38] sm:$0xff]
    %v165 = vld [vmem:[#allocation2 + $0x40] sm:$0xff]
    %v166 = vld [vmem:[#allocation2 + $0x48] sm:$0xff]
    %v167 = vld [vmem:[#allocation2 + $0x50] sm:$0xff]
    %v168 = vld [vmem:[#allocation2 + $0x58] sm:$0xff]
    %v169 = vld [vmem:[#allocation2 + $0x60] sm:$0xff]
    %v170 = vld [vmem:[#allocation2 + $0x68] sm:$0xff]
    %v171 = vld [vmem:[#allocation2 + $0x70] sm:$0xff]
    %v172 = vld [vmem:[#allocation2 + $0x78] sm:$0xff]
    %v173 = vld [vmem:[%s4] sm:$0x1]
    %v175 = vlaneseq
    %v176 = vshrl.u32 %v175, 7
    %v177 = vsub.s32 0, %v176
    %v178 = vrot.slane %v173, %v177
    %180 = vmatprep.subr.mxu0 0.0
    %181 = vmatpush1.msra.mxu0 %v157
    %182 = vmatprep.subr.mxu0 0.0
    %183 = vmatpush1.msra.mxu0 %v158
    %184 = vmatprep.subr.mxu0 0.0
    %185 = vmatpush1.msra.mxu0 %v159
    %186 = vmatprep.subr.mxu0 0.0
    %187 = vmatpush1.msra.mxu0 %v160
    %188 = vmatprep.subr.mxu0 0.0
    %189 = vmatpush1.msra.mxu0 %v161
    %190 = vmatprep.subr.mxu0 0.0
    %191 = vmatpush1.msra.mxu0 %v162
    %192 = vmatprep.subr.mxu0 0.0
    %193 = vmatpush1.msra.mxu0 %v163
    %194 = vmatprep.subr.mxu0 0.0
    %195 = vmatpush1.msra.mxu0 %v164
    %196 = vmatprep.subr.mxu0 0.0
    %197 = vmatpush1.msra.mxu0 %v165
    %198 = vmatprep.subr.mxu0 0.0
    %199 = vmatpush1.msra.mxu0 %v166
    %200 = vmatprep.subr.mxu0 0.0
    %201 = vmatpush1.msra.mxu0 %v167
    %202 = vmatprep.subr.mxu0 0.0
    %203 = vmatpush1.msra.mxu0 %v168
    %204 = vmatprep.subr.mxu0 0.0
    %205 = vmatpush1.msra.mxu0 %v169
    %206 = vmatprep.subr.mxu0 0.0
    %207 = vmatpush1.msra.mxu0 %v170
    %208 = vmatprep.subr.mxu0 0.0
    %209 = vmatpush1.msra.mxu0 %v171
    %210 = vmatprep.subr.mxu0 0.0
    %211 = vmatpush1.msra.mxu0 %v172
    %212 = vmatprep.subr.mxu0 0.0
    %213 = vmatpush1.msra.mxu0 0.0
    %214 = vmatprep.subr.mxu0 0.0
    %215 = vmatpush1.msra.mxu0 0.0
    %216 = vmatprep.subr.mxu0 0.0
    %217 = vmatpush1.msra.mxu0 0.0
    %218 = vmatprep.subr.mxu0 0.0
    %219 = vmatpush1.msra.mxu0 0.0
    %220 = vmatprep.subr.mxu0 0.0
    %221 = vmatpush1.msra.mxu0 0.0
    %222 = vmatprep.subr.mxu0 0.0
    %223 = vmatpush1.msra.mxu0 0.0
    %224 = vmatprep.subr.mxu0 0.0
    %225 = vmatpush1.msra.mxu0 0.0
    %226 = vmatprep.subr.mxu0 0.0
    %227 = vmatpush1.msra.mxu0 0.0
    %228 = vmatprep.subr.mxu0 0.0
    %229 = vmatpush1.msra.mxu0 0.0
    %230 = vmatprep.subr.mxu0 0.0
    %231 = vmatpush1.msra.mxu0 0.0
    %232 = vmatprep.subr.mxu0 0.0
    %233 = vmatpush1.msra.mxu0 0.0
    %234 = vmatprep.subr.mxu0 0.0
    %235 = vmatpush1.msra.mxu0 0.0
    %236 = vmatprep.subr.mxu0 0.0
    %237 = vmatpush1.msra.mxu0 0.0
    %238 = vmatprep.subr.mxu0 0.0
    %239 = vmatpush1.msra.mxu0 0.0
    %240 = vmatprep.subr.mxu0 0.0
    %241 = vmatpush1.msra.mxu0 0.0
    %242 = vmatprep.subr.mxu0 0.0
    %243 = vmatpush1.msra.mxu0 0.0
    %244 = vmatprep.mubr.f32.mxu0 0.0
    %245 = vmatmul.mubr.f32.gmra.mrb[0].mxu0 %v156
    %v246 = vpop.f32.mrb[0].mxu0
    %v247 = vadd.f32 %v178, %v246
    %v248 = vpop.f32.mrb[0].mxu0
    %249 = vdwg.mxu0
    %v250 = vmul.f32 %v247, 0.1
    %v251 = vmax.f32 %v247, %v250
    %v252 = vld [vmem:[#allocation5] sm:$0xff]
    %v253 = vld [vmem:[#allocation5 + $0x8] sm:$0xff]
    %v254 = vld [vmem:[#allocation5 + $0x10] sm:$0xff]
    %v255 = vld [vmem:[#allocation5 + $0x18] sm:$0xff]
    %v256 = vld [vmem:[#allocation5 + $0x20] sm:$0xff]
    %v257 = vld [vmem:[#allocation5 + $0x28] sm:$0xff]
    %v258 = vld [vmem:[#allocation5 + $0x30] sm:$0xff]
    %v259 = vld [vmem:[#allocation5 + $0x38] sm:$0xff]
    %v260 = vld [vmem:[#allocation5 + $0x40] sm:$0xff]
    %v261 = vld [vmem:[#allocation5 + $0x48] sm:$0xff]
    %v262 = vld [vmem:[#allocation5 + $0x50] sm:$0xff]
    %v263 = vld [vmem:[#allocation5 + $0x58] sm:$0xff]
    %v264 = vld [vmem:[#allocation5 + $0x60] sm:$0xff]
    %v265 = vld [vmem:[#allocation5 + $0x68] sm:$0xff]
    %v266 = vld [vmem:[#allocation5 + $0x70] sm:$0xff]
    %v267 = vld [vmem:[#allocation5 + $0x78] sm:$0xff]
    %v268 = vld [vmem:[%s6] sm:$0x1]
    %v270 = vlaneseq
    %v271 = vshrl.u32 %v270, 7
    %v272 = vsub.s32 0, %v271
    %v273 = vrot.slane %v268, %v272
    %275 = vmatprep.subr.mxu0 0.0
    %276 = vmatpush1.msra.mxu0 %v252
    %277 = vmatprep.subr.mxu0 0.0
    %278 = vmatpush1.msra.mxu0 %v253
    %279 = vmatprep.subr.mxu0 0.0
    %280 = vmatpush1.msra.mxu0 %v254
    %281 = vmatprep.subr.mxu0 0.0
    %282 = vmatpush1.msra.mxu0 %v255
    %283 = vmatprep.subr.mxu0 0.0
    %284 = vmatpush1.msra.mxu0 %v256
    %285 = vmatprep.subr.mxu0 0.0
    %286 = vmatpush1.msra.mxu0 %v257
    %287 = vmatprep.subr.mxu0 0.0
    %288 = vmatpush1.msra.mxu0 %v258
    %289 = vmatprep.subr.mxu0 0.0
    %290 = vmatpush1.msra.mxu0 %v259
    %291 = vmatprep.subr.mxu0 0.0
    %292 = vmatpush1.msra.mxu0 %v260
    %293 = vmatprep.subr.mxu0 0.0
    %294 = vmatpush1.msra.mxu0 %v261
    %295 = vmatprep.subr.mxu0 0.0
    %296 = vmatpush1.msra.mxu0 %v262
    %297 = vmatprep.subr.mxu0 0.0
    %298 = vmatpush1.msra.mxu0 %v263
    %299 = vmatprep.subr.mxu0 0.0
    %300 = vmatpush1.msra.mxu0 %v264
    %301 = vmatprep.subr.mxu0 0.0
    %302 = vmatpush1.msra.mxu0 %v265
    %303 = vmatprep.subr.mxu0 0.0
    %304 = vmatpush1.msra.mxu0 %v266
    %305 = vmatprep.subr.mxu0 0.0
    %306 = vmatpush1.msra.mxu0 %v267
    %307 = vmatprep.subr.mxu0 0.0
    %308 = vmatpush1.msra.mxu0 0.0
    %309 = vmatprep.subr.mxu0 0.0
    %310 = vmatpush1.msra.mxu0 0.0
    %311 = vmatprep.subr.mxu0 0.0
    %312 = vmatpush1.msra.mxu0 0.0
    %313 = vmatprep.subr.mxu0 0.0
    %314 = vmatpush1.msra.mxu0 0.0
    %315 = vmatprep.subr.mxu0 0.0
    %316 = vmatpush1.msra.mxu0 0.0
    %317 = vmatprep.subr.mxu0 0.0
    %318 = vmatpush1.msra.mxu0 0.0
    %319 = vmatprep.subr.mxu0 0.0
    %320 = vmatpush1.msra.mxu0 0.0
    %321 = vmatprep.subr.mxu0 0.0
    %322 = vmatpush1.msra.mxu0 0.0
    %323 = vmatprep.subr.mxu0 0.0
    %324 = vmatpush1.msra.mxu0 0.0
    %325 = vmatprep.subr.mxu0 0.0
    %326 = vmatpush1.msra.mxu0 0.0
    %327 = vmatprep.subr.mxu0 0.0
    %328 = vmatpush1.msra.mxu0 0.0
    %329 = vmatprep.subr.mxu0 0.0
    %330 = vmatpush1.msra.mxu0 0.0
    %331 = vmatprep.subr.mxu0 0.0
    %332 = vmatpush1.msra.mxu0 0.0
    %333 = vmatprep.subr.mxu0 0.0
    %334 = vmatpush1.msra.mxu0 0.0
    %335 = vmatprep.subr.mxu0 0.0
    %336 = vmatpush1.msra.mxu0 0.0
    %337 = vmatprep.subr.mxu0 0.0
    %338 = vmatpush1.msra.mxu0 0.0
    %339 = vmatprep.mubr.f32.mxu0 0.0
    %340 = vmatmul.mubr.f32.gmra.mrb[0].mxu0 %v251
    %v341 = vpop.f32.mrb[0].mxu0
    %v342 = vadd.f32 %v273, %v341
    %v343 = vpop.f32.mrb[0].mxu0
    %344 = vdwg.mxu0
    %v345 = vmul.f32 %v342, 0.1
    %v346 = vmax.f32 %v342, %v345
    %v347 = vld [vmem:[%s7] sm:$0xff]
    %v348 = vld [vmem:[%s7 + $0x8] sm:$0xff]
    %v349 = vld [vmem:[%s7 + $0x10] sm:$0xff]
    %v350 = vld [vmem:[%s7 + $0x18] sm:$0xff]
    %v351 = vld [vmem:[%s7 + $0x20] sm:$0xff]
    %v352 = vld [vmem:[%s7 + $0x28] sm:$0xff]
    %v353 = vld [vmem:[%s7 + $0x30] sm:$0xff]
    %v354 = vld [vmem:[%s7 + $0x38] sm:$0xff]
    %v355 = vld [vmem:[%s7 + $0x40] sm:$0xff]
    %v356 = vld [vmem:[%s7 + $0x48] sm:$0xff]
    %v357 = vld [vmem:[%s7 + $0x50] sm:$0xff]
    %v358 = vld [vmem:[%s7 + $0x58] sm:$0xff]
    %v359 = vld [vmem:[%s7 + $0x60] sm:$0xff]
    %v360 = vld [vmem:[%s7 + $0x68] sm:$0xff]
    %v361 = vld [vmem:[%s7 + $0x70] sm:$0xff]
    %v362 = vld [vmem:[%s7 + $0x78] sm:$0xff]
    %v363 = vld [vmem:[%s8] sm:$0x1]
    %v365 = vlaneseq
    %v366 = vshrl.u32 %v365, 7
    %v367 = vsub.s32 0, %v366
    %v368 = vrot.slane %v363, %v367
    %370 = vmatprep.subr.mxu0 0.0
    %371 = vmatpush1.msra.mxu0 %v347
    %372 = vmatprep.subr.mxu0 0.0
    %373 = vmatpush1.msra.mxu0 %v348
    %374 = vmatprep.subr.mxu0 0.0
    %375 = vmatpush1.msra.mxu0 %v349
    %376 = vmatprep.subr.mxu0 0.0
    %377 = vmatpush1.msra.mxu0 %v350
    %378 = vmatprep.subr.mxu0 0.0
    %379 = vmatpush1.msra.mxu0 %v351
    %380 = vmatprep.subr.mxu0 0.0
    %381 = vmatpush1.msra.mxu0 %v352
    %382 = vmatprep.subr.mxu0 0.0
    %383 = vmatpush1.msra.mxu0 %v353
    %384 = vmatprep.subr.mxu0 0.0
    %385 = vmatpush1.msra.mxu0 %v354
    %386 = vmatprep.subr.mxu0 0.0
    %387 = vmatpush1.msra.mxu0 %v355
    %388 = vmatprep.subr.mxu0 0.0
    %389 = vmatpush1.msra.mxu0 %v356
    %390 = vmatprep.subr.mxu0 0.0
    %391 = vmatpush1.msra.mxu0 %v357
    %392 = vmatprep.subr.mxu0 0.0
    %393 = vmatpush1.msra.mxu0 %v358
    %394 = vmatprep.subr.mxu0 0.0
    %395 = vmatpush1.msra.mxu0 %v359
    %396 = vmatprep.subr.mxu0 0.0
    %397 = vmatpush1.msra.mxu0 %v360
    %398 = vmatprep.subr.mxu0 0.0
    %399 = vmatpush1.msra.mxu0 %v361
    %400 = vmatprep.subr.mxu0 0.0
    %401 = vmatpush1.msra.mxu0 %v362
    %402 = vmatprep.subr.mxu0 0.0
    %403 = vmatpush1.msra.mxu0 0.0
    %404 = vmatprep.subr.mxu0 0.0
    %405 = vmatpush1.msra.mxu0 0.0
    %406 = vmatprep.subr.mxu0 0.0
    %407 = vmatpush1.msra.mxu0 0.0
    %408 = vmatprep.subr.mxu0 0.0
    %409 = vmatpush1.msra.mxu0 0.0
    %410 = vmatprep.subr.mxu0 0.0
    %411 = vmatpush1.msra.mxu0 0.0
    %412 = vmatprep.subr.mxu0 0.0
    %413 = vmatpush1.msra.mxu0 0.0
    %414 = vmatprep.subr.mxu0 0.0
    %415 = vmatpush1.msra.mxu0 0.0
    %416 = vmatprep.subr.mxu0 0.0
    %417 = vmatpush1.msra.mxu0 0.0
    %418 = vmatprep.subr.mxu0 0.0
    %419 = vmatpush1.msra.mxu0 0.0
    %420 = vmatprep.subr.mxu0 0.0
    %421 = vmatpush1.msra.mxu0 0.0
    %422 = vmatprep.subr.mxu0 0.0
    %423 = vmatpush1.msra.mxu0 0.0
    %424 = vmatprep.subr.mxu0 0.0
    %425 = vmatpush1.msra.mxu0 0.0
    %426 = vmatprep.subr.mxu0 0.0
    %427 = vmatpush1.msra.mxu0 0.0
    %428 = vmatprep.subr.mxu0 0.0
    %429 = vmatpush1.msra.mxu0 0.0
    %430 = vmatprep.subr.mxu0 0.0
    %431 = vmatpush1.msra.mxu0 0.0
    %432 = vmatprep.subr.mxu0 0.0
    %433 = vmatpush1.msra.mxu0 0.0
    %434 = vmatprep.mubr.f32.mxu0 0.0
    %435 = vmatmul.mubr.f32.gmra.mrb[0].mxu0 %v346
    %v436 = vpop.f32.mrb[0].mxu0
    %v437 = vadd.f32 %v368, %v436
    %v438 = vpop.f32.mrb[0].mxu0
    %439 = vdwg.mxu0
    %vm440 = vcmask 48128
    %441 = vst.msk [vmem:[#allocation7] sm:$0xff] %vm440, %v437
    // Predicated region
    $region46: #{tpu_custom_call.1} parent=1 // pred_check
      _
    $region47: #{tpu_custom_call.1} parent=1 // pred_check_branch
      %443 = sbr.rel (0) target = $region49
    $region48: #{tpu_custom_call.1} parent=1 // pred_region
      %s445 = ssub.s32 128, 128
      %446 = vsyncadd [#allocation4], %s445
      %s448 = sshll.u32 [#allocation7], 4
      %s449 = int_to_ptr.vmem [resolvable:$true] %s448
      %451 = dma.vmem_to_hbm [thread:$0]  %s449, 128, %s9, [#allocation4]
    $region49: #{tpu_custom_call.1} parent=1 // pred_fallthru
      _
    // Predicated region
    $region50: #{tpu_custom_call.1} parent=1 // pred_check
      _
    $region51: #{tpu_custom_call.1} parent=1 // pred_check_branch
      %453 = sbr.rel (0) target = $region53
    $region52: #{tpu_custom_call.1} parent=1 // pred_region
      %454 = dma.done [#allocation4], 128
    $region53: #{tpu_custom_call.1} parent=1 // pred_fallthru
      _
    %455 = vsyncpa [#allocation3], 1
    %456 = vsyncpa [#allocation6], 1
    %457 = vsyncpa [#allocation4], 1

</llo_original>
